<compile_context>
chip_gen: v6e
topology: v6e:2x2x1
jax: 0.10.0
libtpu: 0.0.40
codegen_flags: <defaults>
</compile_context>

<pallas_src>
import jax
import jax.numpy as jnp
from jax.experimental import pallas as pl
from jax.experimental.pallas import tpu as pltpu

FEAT = 32
N_LAYERS = 4


def bp_net_kernel(xT_ref, w_ref, b_ref, oT_ref):
    # xT_ref: (32, TILE_B) f32   activations, batch on the lane axis
    # w_ref : (4, 32, 32)  bf16  PyTorch (out, in) layout, VMEM-resident
    # b_ref : (32, 4)      f32   one bias column per layer
    # oT_ref: (32, TILE_B) f32
    h = xT_ref[...]                              # f32 (32, TILE_B)
    b = b_ref[...]                               # f32 (32, 4)
    for i in range(N_LAYERS):
        # h^T = W @ h^T  ==  (x @ W^T)^T ; bf16 into the MXU, f32 accumulate.
        z = jnp.dot(w_ref[i], h.astype(jnp.bfloat16),
                    preferred_element_type=jnp.float32)
        z = z + b[:, i:i + 1]                    # bias broadcast along lanes
        h = jnp.maximum(z, 0.0) if i < N_LAYERS - 1 else z
    # Softmax over the feature axis (sublane axis in this layout).
    m = jnp.max(h, axis=0, keepdims=True)
    e = jnp.exp(h - m)
    denom = jnp.sum(e, axis=0, keepdims=True)
    oT_ref[...] = (e * pl.reciprocal(denom, approx=True)).astype(oT_ref.dtype)


def _round_up(n, m):
    return ((n + m - 1) // m) * m


def bp_net_forward(x, w_all, b_all, *, tile_b=1024):
    """x: (B, 32) f32.  w_all: (4, 32, 32) f32 (PyTorch (out, in) layout).
    b_all: (4, 32) f32.  Returns (B, 32) softmax probabilities."""
    B, F = x.shape
    assert F == FEAT and w_all.shape == (N_LAYERS, FEAT, FEAT)

    tile_b = min(tile_b, _round_up(B, 128))      # lane-dense: multiple of 128
    n_tiles = (B + tile_b - 1) // tile_b
    b_pad = n_tiles * tile_b

    # Present data transposed + zero-padded (one transpose outside the kernel;
    # padded columns are sliced off below).
    xT = jnp.pad(x, ((0, b_pad - B), (0, 0))).T          # (32, B_pad) f32
    w_bf16 = w_all.astype(jnp.bfloat16)                   # (4, 32, 32) bf16
    bT = b_all.T.astype(jnp.float32)                      # (32, 4) f32

    oT = pl.pallas_call(
        bp_net_kernel,
        out_shape=jax.ShapeDtypeStruct((FEAT, b_pad), jnp.float32),
        grid_spec=pltpu.PrefetchScalarGridSpec(
            num_scalar_prefetch=0,
            grid=(n_tiles,),
            in_specs=[
                pl.BlockSpec((FEAT, tile_b), lambda i: (0, i)),
                pl.BlockSpec((N_LAYERS, FEAT, FEAT), lambda i: (0, 0, 0)),
                pl.BlockSpec((FEAT, N_LAYERS), lambda i: (0, 0)),
            ],
            out_specs=pl.BlockSpec((FEAT, tile_b), lambda i: (0, i)),
        ),
        compiler_params=pltpu.CompilerParams(
            dimension_semantics=("parallel",),
        ),
    )(xT, w_bf16, bT)

    return oT[:, :B].T


def init_params(key):
    """Mimics nn.Linear default init: uniform(-1/sqrt(in), 1/sqrt(in))."""
    bound = 1.0 / (FEAT ** 0.5)
    ws, bs = [], []
    for _ in range(N_LAYERS):
        kw, kb, key = jax.random.split(key, 3)
        ws.append(jax.random.uniform(kw, (FEAT, FEAT), jnp.float32, -bound, bound))
        bs.append(jax.random.uniform(kb, (FEAT,), jnp.float32, -bound, bound))
    return jnp.stack(ws), jnp.stack(bs)          # (4, 32, 32), (4, 32)


def reference_forward(x, w_all, b_all):
    h = x
    for i in range(N_LAYERS):
        h = h @ w_all[i].T + b_all[i]
        if i < N_LAYERS - 1:
            h = jnp.maximum(h, 0.0)
    return jax.nn.softmax(h, axis=-1)


if __name__ == "__main__":
    key = jax.random.PRNGKey(0)
    kx, kp = jax.random.split(key)

    B = 300  # not a multiple of the tile -> exercises padding / tail handling
    x = jax.random.normal(kx, (B, FEAT), jnp.float32)
    w_all, b_all = init_params(kp)

    out = bp_net_forward(x, w_all, b_all, tile_b=128)    # grid = (3,)
    out = jax.block_until_ready(out)

    ref = reference_forward(x, w_all, b_all)
    assert out.shape == (B, FEAT)
    # bf16 MXU inputs + approx reciprocal -> relaxed tolerances vs f32 ref.
    assert jnp.allclose(out, ref, atol=1e-2), "mismatch vs reference"
    assert jnp.allclose(jnp.sum(out, axis=-1), jnp.ones((B,)), atol=5e-3)

    print("KERNEL_OK")
</pallas_src>

<mosaic_0001>
module attributes {stable_mosaic.version = 11 : i64} {
  func.func @bp_net_kernel(%arg0: i32, %arg1: memref<32x128xf32, #tpu.memory_space<vmem>>, %arg2: memref<4x32x32xbf16, #tpu.memory_space<vmem>>, %arg3: memref<32x4xf32, #tpu.memory_space<vmem>>, %arg4: memref<32x128xf32, #tpu.memory_space<vmem>>) attributes {dimension_semantics = [#tpu.dimension_semantics<parallel>], iteration_bounds = array<i64: 3>, scalar_prefetch = 0 : i64, scratch_operands = 0 : i64, tpu.core_type = #tpu.core_type<tc>, window_params = [{transform_indices = @transform_0, window_bounds = array<i64: 32, 128>}, {pipeline_mode = #tpu.pipeline_mode<synchronous>, transform_indices = @transform_1, window_bounds = array<i64: 4, 32, 32>}, {pipeline_mode = #tpu.pipeline_mode<synchronous>, transform_indices = @transform_2, window_bounds = array<i64: 32, 4>}, {transform_indices = @transform_3, window_bounds = array<i64: 32, 128>}]} {
    %c0 = arith.constant 0 : index
    %c0_0 = arith.constant 0 : index
    %0 = vector.load %arg1[%c0, %c0_0] : memref<32x128xf32, #tpu.memory_space<vmem>>, vector<32x128xf32>
    %c0_1 = arith.constant 0 : index
    %c0_2 = arith.constant 0 : index
    %1 = vector.load %arg3[%c0_1, %c0_2] : memref<32x4xf32, #tpu.memory_space<vmem>>, vector<32x4xf32>
    %c0_3 = arith.constant 0 : index
    %c0_4 = arith.constant 0 : index
    %c0_5 = arith.constant 0 : index
    %2 = vector.load %arg2[%c0_3, %c0_4, %c0_5] : memref<4x32x32xbf16, #tpu.memory_space<vmem>>, vector<1x32x32xbf16>
    %3 = vector.shape_cast %2 : vector<1x32x32xbf16> to vector<32x32xbf16>
    %4 = arith.truncf %0 : vector<32x128xf32> to vector<32x128xbf16>
    %cst = arith.constant dense<0.000000e+00> : vector<32x128xf32>
    %5 = tpu.matmul %3, %4, %cst {dimension_numbers = #tpu.dot_dimension_numbers<[1], [0], [0], [1], [0, 0, 1, 1], [], []>} : vector<32x32xbf16>, vector<32x128xbf16>, vector<32x128xf32> -> vector<32x128xf32>
    %6 = vector.extract_strided_slice %1 {offsets = [0, 0], sizes = [32, 1], strides = [1, 1]} : vector<32x4xf32> to vector<32x1xf32>
    %7 = vector.broadcast %6 : vector<32x1xf32> to vector<32x128xf32>
    %8 = arith.addf %5, %7 : vector<32x128xf32>
    %cst_6 = arith.constant 0.000000e+00 : f32
    %9 = vector.broadcast %cst_6 : f32 to vector<32x128xf32>
    %10 = arith.maximumf %8, %9 : vector<32x128xf32>
    %c1 = arith.constant 1 : index
    %c0_7 = arith.constant 0 : index
    %c0_8 = arith.constant 0 : index
    %11 = vector.load %arg2[%c1, %c0_7, %c0_8] : memref<4x32x32xbf16, #tpu.memory_space<vmem>>, vector<1x32x32xbf16>
    %12 = vector.shape_cast %11 : vector<1x32x32xbf16> to vector<32x32xbf16>
    %13 = arith.truncf %10 : vector<32x128xf32> to vector<32x128xbf16>
    %cst_9 = arith.constant dense<0.000000e+00> : vector<32x128xf32>
    %14 = tpu.matmul %12, %13, %cst_9 {dimension_numbers = #tpu.dot_dimension_numbers<[1], [0], [0], [1], [0, 0, 1, 1], [], []>} : vector<32x32xbf16>, vector<32x128xbf16>, vector<32x128xf32> -> vector<32x128xf32>
    %15 = vector.extract_strided_slice %1 {offsets = [0, 1], sizes = [32, 1], strides = [1, 1]} : vector<32x4xf32> to vector<32x1xf32>
    %16 = vector.broadcast %15 : vector<32x1xf32> to vector<32x128xf32>
    %17 = arith.addf %14, %16 : vector<32x128xf32>
    %cst_10 = arith.constant 0.000000e+00 : f32
    %18 = vector.broadcast %cst_10 : f32 to vector<32x128xf32>
    %19 = arith.maximumf %17, %18 : vector<32x128xf32>
    %c2 = arith.constant 2 : index
    %c0_11 = arith.constant 0 : index
    %c0_12 = arith.constant 0 : index
    %20 = vector.load %arg2[%c2, %c0_11, %c0_12] : memref<4x32x32xbf16, #tpu.memory_space<vmem>>, vector<1x32x32xbf16>
    %21 = vector.shape_cast %20 : vector<1x32x32xbf16> to vector<32x32xbf16>
    %22 = arith.truncf %19 : vector<32x128xf32> to vector<32x128xbf16>
    %cst_13 = arith.constant dense<0.000000e+00> : vector<32x128xf32>
    %23 = tpu.matmul %21, %22, %cst_13 {dimension_numbers = #tpu.dot_dimension_numbers<[1], [0], [0], [1], [0, 0, 1, 1], [], []>} : vector<32x32xbf16>, vector<32x128xbf16>, vector<32x128xf32> -> vector<32x128xf32>
    %24 = vector.extract_strided_slice %1 {offsets = [0, 2], sizes = [32, 1], strides = [1, 1]} : vector<32x4xf32> to vector<32x1xf32>
    %25 = vector.broadcast %24 : vector<32x1xf32> to vector<32x128xf32>
    %26 = arith.addf %23, %25 : vector<32x128xf32>
    %cst_14 = arith.constant 0.000000e+00 : f32
    %27 = vector.broadcast %cst_14 : f32 to vector<32x128xf32>
    %28 = arith.maximumf %26, %27 : vector<32x128xf32>
    %c3 = arith.constant 3 : index
    %c0_15 = arith.constant 0 : index
    %c0_16 = arith.constant 0 : index
    %29 = vector.load %arg2[%c3, %c0_15, %c0_16] : memref<4x32x32xbf16, #tpu.memory_space<vmem>>, vector<1x32x32xbf16>
    %30 = vector.shape_cast %29 : vector<1x32x32xbf16> to vector<32x32xbf16>
    %31 = arith.truncf %28 : vector<32x128xf32> to vector<32x128xbf16>
    %cst_17 = arith.constant dense<0.000000e+00> : vector<32x128xf32>
    %32 = tpu.matmul %30, %31, %cst_17 {dimension_numbers = #tpu.dot_dimension_numbers<[1], [0], [0], [1], [0, 0, 1, 1], [], []>} : vector<32x32xbf16>, vector<32x128xbf16>, vector<32x128xf32> -> vector<32x128xf32>
    %33 = vector.extract_strided_slice %1 {offsets = [0, 3], sizes = [32, 1], strides = [1, 1]} : vector<32x4xf32> to vector<32x1xf32>
    %34 = vector.broadcast %33 : vector<32x1xf32> to vector<32x128xf32>
    %35 = arith.addf %32, %34 : vector<32x128xf32>
    %cst_18 = arith.constant dense<0xFF800000> : vector<128xf32>
    %36 = vector.multi_reduction <maximumf>, %35, %cst_18 [0] : vector<32x128xf32> to vector<128xf32>
    %37 = vector.shape_cast %36 : vector<128xf32> to vector<1x128xf32>
    %38 = vector.broadcast %37 : vector<1x128xf32> to vector<32x128xf32>
    %39 = arith.subf %35, %38 : vector<32x128xf32>
    %40 = math.exp %39 : vector<32x128xf32>
    %cst_19 = arith.constant dense<0.000000e+00> : vector<128xf32>
    %41 = vector.multi_reduction <add>, %40, %cst_19 [0] : vector<32x128xf32> to vector<128xf32>
    %42 = vector.shape_cast %41 : vector<128xf32> to vector<1x128xf32>
    %43 = tpu.reciprocal %42 {approx = true} : vector<1x128xf32> -> vector<1x128xf32>
    %44 = vector.broadcast %43 : vector<1x128xf32> to vector<32x128xf32>
    %45 = arith.mulf %40, %44 : vector<32x128xf32>
    %c0_20 = arith.constant 0 : index
    %c0_21 = arith.constant 0 : index
    %46 = vector.load %arg4[%c0_20, %c0_21] : memref<32x128xf32, #tpu.memory_space<vmem>>, vector<32x128xf32>
    tpu.vector_store %arg4[%c0_20, %c0_21], %45 {strides = array<i32>} : memref<32x128xf32, #tpu.memory_space<vmem>>, vector<32x128xf32>,
    return
  }
  func.func @transform_0(%arg0: i32) -> (i32, i32) {
    %c0_i32 = arith.constant 0 : i32
    %c0_i32_0 = arith.constant 0 : i32
    return %c0_i32, %arg0 : i32, i32
  }
  func.func @transform_1(%arg0: i32) -> (i32, i32, i32) {
    %c0_i32 = arith.constant 0 : i32
    %c0_i32_0 = arith.constant 0 : i32
    %c0_i32_1 = arith.constant 0 : i32
    %c0_i32_2 = arith.constant 0 : i32
    return %c0_i32, %c0_i32_0, %c0_i32_1 : i32, i32, i32
  }
  func.func @transform_2(%arg0: i32) -> (i32, i32) {
    %c0_i32 = arith.constant 0 : i32
    %c0_i32_0 = arith.constant 0 : i32
    %c0_i32_1 = arith.constant 0 : i32
    return %c0_i32, %c0_i32_0 : i32, i32
  }
  func.func @transform_3(%arg0: i32) -> (i32, i32) {
    %c0_i32 = arith.constant 0 : i32
    %c0_i32_0 = arith.constant 0 : i32
    return %c0_i32, %arg0 : i32, i32
  }
}

</mosaic_0001>

<llo_original>
// kernel: tpu_custom_call.1
$region0: #{tpu_custom_call.1}
  #allocation0 [shape = 'u32[]', space=smem, size = 0x4, offset = 0x4, fixed_abs, tag = 'smem constant byte address 0x4 - core index']
  #allocation1 [shape = 'u32[144,128]{1,0:T(1,128)}', space=vmem, size = 0x12000, scoped, tag = 'internal scratch']
  %s0 = inlined_call_operand.hbm [shape: f32[32,384], index: 0, kind: input, shape index: {}]
  %s1 = inlined_call_operand.hbm [shape: bf16[4,32,32], index: 1, kind: input, shape index: {}]
  %s2 = inlined_call_operand.vmem [shape: f32[32,4], index: 2, kind: input, shape index: {}]
  %s3 = inlined_call_operand.hbm [shape: f32[32,384], index: 3, kind: output, shape index: {}]
  %s4 = sld [smem:[#allocation0]]
  $region53: #{tpu_custom_call.1} parent=0
    _
  %s6 = ssub.s32 1, %s4
  %s7 = scalar_select 0, %s6, %s4
  $region1: #{tpu_custom_call.1} parent=0
    #allocation2 [shape = 'u8[32768]{0}', space=vmem, size = 0x8000, scoped, tag = 'input window, operand 0']
    #allocation3 [shape = 's32[2]{0}', space=sflag, size = 0x8, scoped, tag = 'scoped memory for tpu_custom_call.1']
    #allocation4 [shape = 's32[2]{0}', space=sflag, size = 0x8, scoped, tag = 'scoped memory for tpu_custom_call.1']
    #allocation5 [shape = 'u8[32768]{0}', space=vmem, size = 0x8000, scoped, tag = 'input window, operand 1, single buffered']
    #allocation6 [shape = 's32[1]{0}', space=sflag, size = 0x4, scoped, tag = 'scoped memory for tpu_custom_call.1']
    #allocation7 [shape = 'u8[32768]{0}', space=vmem, size = 0x8000, scoped, tag = 'output window, operand 0']
    %8 = vsyncpa [#allocation3], 0
    %s9 = scalar_lea.sflag [#allocation3], 1
    %10 = vsyncpa %s9, 0
    %11 = vsyncpa [#allocation6], 0
    %12 = vsyncpa [#allocation4], 0
    %s13 = scalar_lea.sflag [#allocation4], 1
    %14 = vsyncpa %s13, 0
    loop: start=0, step=1, limit=5
    $region2: #{tpu_custom_call.1} parent=1 // loop_pre_header
      _
    $region3: #{tpu_custom_call.1} parent=1 // loop_header
      %s16 = sphi 0, %s20
      %p17 = scmp.ge.s32.totalorder %s16, 5
      %s26 = sphi 0, %s28
      %s29 = sphi 0, %s26
      %s30 = sphi 0, %s29
      %s46 = sphi 0, %s30
      %s50 = sphi 0, %s50
      %s52 = sphi 0, %s50
      %s53 = sphi 0, %s52
      %s67 = sphi 0, %s53
      %s71 = sphi 0, %s71
      %s73 = sphi 0, %s71
      %s74 = sphi 0, %s73
      %s88 = sphi 0, %s74
      %s94 = sphi 0, %s96
      %s97 = sphi 0, %s94
      %s98 = sphi 0, %s97
      %s114 = sphi 0, %s98
    $region4: #{tpu_custom_call.1} parent=1 // loop_header_branch
      %19 = sbr.rel (%p17) target = $region8
    $region5: #{tpu_custom_call.1} parent=1 // loop_body
      %s21 = ssub.s32 %s16, 1
      %s22 = ssub.s32 %s16, 2
      %s23 = sadd.s32 %s16, 1
      %s24 = ssub.s32 %s16, %s23
      %p25 = scmp.eq.s32.totalorder %s24, 0
      %s27 = sadd.s32 %s26, 1
      %s28 = scalar_select %p25, %s26, %s27
      %p31 = pneg %p25
      %p32 = scmp.eq.s32.totalorder %s16, 2
      %p33 = por %p31, %p32
      %p34 = scmp.ne.s32.totalorder %s26, %s29
      %p35 = scmp.eq.s32.totalorder %s16, 0
      %p36 = por %p34, %p35
      %p37 = scmp.ne.s32.totalorder %s26, %s29
      %p38 = scmp.eq.s32.totalorder %s21, 2
      %p39 = por %p37, %p38
      %p40 = scmp.ne.s32.totalorder %s29, %s30
      %p41 = scmp.eq.s32.totalorder %s21, 0
      %p42 = por %p40, %p41
      %p43 = scmp.ne.s32.totalorder %s29, %s30
      %p44 = scmp.eq.s32.totalorder %s22, 2
      %p45 = por %p43, %p44
      %p47 = scmp.ne.s32.totalorder %s30, %s46
      %p48 = scmp.eq.s32.totalorder %s22, 0
      %p49 = por %p47, %p48
      %s51 = sadd.s32 %s50, 1
      %p54 = scmp.eq.s32.totalorder %s16, 2
      %p55 = scmp.ne.s32.totalorder %s50, %s52
      %p56 = scmp.eq.s32.totalorder %s16, 0
      %p57 = por %p55, %p56
      %p58 = scmp.ne.s32.totalorder %s50, %s52
      %p59 = scmp.eq.s32.totalorder %s21, 2
      %p60 = por %p58, %p59
      %p61 = scmp.ne.s32.totalorder %s52, %s53
      %p62 = scmp.eq.s32.totalorder %s21, 0
      %p63 = por %p61, %p62
      %p64 = scmp.ne.s32.totalorder %s52, %s53
      %p65 = scmp.eq.s32.totalorder %s22, 2
      %p66 = por %p64, %p65
      %p68 = scmp.ne.s32.totalorder %s53, %s67
      %p69 = scmp.eq.s32.totalorder %s22, 0
      %p70 = por %p68, %p69
      %s72 = sadd.s32 %s71, 1
      %p75 = scmp.eq.s32.totalorder %s16, 2
      %p76 = scmp.ne.s32.totalorder %s71, %s73
      %p77 = scmp.eq.s32.totalorder %s16, 0
      %p78 = por %p76, %p77
      %p79 = scmp.ne.s32.totalorder %s71, %s73
      %p80 = scmp.eq.s32.totalorder %s21, 2
      %p81 = por %p79, %p80
      %p82 = scmp.ne.s32.totalorder %s73, %s74
      %p83 = scmp.eq.s32.totalorder %s21, 0
      %p84 = por %p82, %p83
      %p85 = scmp.ne.s32.totalorder %s73, %s74
      %p86 = scmp.eq.s32.totalorder %s22, 2
      %p87 = por %p85, %p86
      %p89 = scmp.ne.s32.totalorder %s74, %s88
      %p90 = scmp.eq.s32.totalorder %s22, 0
      %p91 = por %p89, %p90
      %s92 = ssub.s32 %s16, %s23
      %p93 = scmp.eq.s32.totalorder %s92, 0
      %s95 = sadd.s32 %s94, 1
      %s96 = scalar_select %p93, %s94, %s95
      %p99 = pneg %p93
      %p100 = scmp.eq.s32.totalorder %s16, 2
      %p101 = por %p99, %p100
      %p102 = scmp.ne.s32.totalorder %s94, %s97
      %p103 = scmp.eq.s32.totalorder %s16, 0
      %p104 = por %p102, %p103
      %p105 = scmp.ne.s32.totalorder %s94, %s97
      %p106 = scmp.eq.s32.totalorder %s21, 2
      %p107 = por %p105, %p106
      %p108 = scmp.ne.s32.totalorder %s97, %s98
      %p109 = scmp.eq.s32.totalorder %s21, 0
      %p110 = por %p108, %p109
      %p111 = scmp.ne.s32.totalorder %s97, %s98
      %p112 = scmp.eq.s32.totalorder %s22, 2
      %p113 = por %p111, %p112
      %p115 = scmp.ne.s32.totalorder %s98, %s114
      %p116 = scmp.eq.s32.totalorder %s22, 0
      %p117 = por %p115, %p116
      %p118 = scmp.le.s32.totalorder 1, %s16
      %p119 = scmp.lt.s32.totalorder %s16, 4
      %p120 = pnand %p118, %p119
      %p121 = pneg %p120
      // Predicated region
      $region9: #{tpu_custom_call.1} parent=5 // pred_check
        _
      $region10: #{tpu_custom_call.1} parent=5 // pred_check_branch
        %123 = sbr.rel (%p120) target = $region12
      $region11: #{tpu_custom_call.1} parent=5 // pred_region
        %s124 = ssub.s32 %s16, 1
        // Predicated region
        $region13: #{tpu_custom_call.1} parent=11 // pred_check
          %p125 = pneg %p63
        $region14: #{tpu_custom_call.1} parent=11 // pred_check_branch
          %127 = sbr.rel (%p125) target = $region16
        $region15: #{tpu_custom_call.1} parent=11 // pred_region
          %s129 = ssub.s32 1024, 1024
          %130 = vsyncadd [#allocation6], %s129
          %s131 = sshll.u32 [#allocation5], 4
          %s132 = int_to_ptr.vmem [resolvable:$true] %s131
          %137 = dma.hbm_to_vmem [thread:$0]  %s1, 1024, %s132, [#allocation6], 64, 64, 4
        $region16: #{tpu_custom_call.1} parent=11 // pred_fallthru
          _
        // Predicated region
        $region17: #{tpu_custom_call.1} parent=11 // pred_check
          %p138 = pneg %p84
        $region18: #{tpu_custom_call.1} parent=11 // pred_check_branch
          %140 = sbr.rel (%p138) target = $region20
        $region19: #{tpu_custom_call.1} parent=11 // pred_region
          _
        $region20: #{tpu_custom_call.1} parent=11 // pred_fallthru
          _
      $region12: #{tpu_custom_call.1} parent=5 // pred_fallthru
        _
      %p141 = scmp.lt.s32.totalorder %s16, 3
      // Predicated region
      $region21: #{tpu_custom_call.1} parent=5 // pred_check
        %p142 = pneg %p141
      $region22: #{tpu_custom_call.1} parent=5 // pred_check_branch
        %144 = sbr.rel (%p142) target = $region24
      $region23: #{tpu_custom_call.1} parent=5 // pred_region
        // Predicated region
        $region25: #{tpu_custom_call.1} parent=23 // pred_check
          %p145 = pneg %p36
        $region26: #{tpu_custom_call.1} parent=23 // pred_check_branch
          %147 = sbr.rel (%p145) target = $region28
        $region27: #{tpu_custom_call.1} parent=23 // pred_region
          %s148 = sand.u32 %s26, 1
          %s149 = scalar_lea.sflag [#allocation3], %s148
          %s150 = sand.u32 %s26, 1
          %s151 = smul.addr %s150, 32
          %s152 = scalar_lea.vmem [#allocation2], %s151
          %s154 = ssub.s32 512, 512
          %155 = vsyncadd %s149, %s154
          %s156 = smul.addr %s16, 128
          %s157 = scalar_lea.hbm %s0, %s156
          %s158 = sshll.u32 %s152, 4
          %s159 = int_to_ptr.vmem [resolvable:$true] %s158
          %164 = dma.hbm_to_vmem [thread:$0]  %s157, 512, %s159, %s149, 384, 128, 8
        $region28: #{tpu_custom_call.1} parent=23 // pred_fallthru
          _
      $region24: #{tpu_custom_call.1} parent=5 // pred_fallthru
        _
      %p165 = scmp.le.s32.totalorder 1, %s16
      %p166 = scmp.lt.s32.totalorder %s16, 4
      %p167 = pnand %p165, %p166
      %p168 = pneg %p167
      // Predicated region
      $region29: #{tpu_custom_call.1} parent=5 // pred_check
        _
      $region30: #{tpu_custom_call.1} parent=5 // pred_check_branch
        %170 = sbr.rel (%p167) target = $region32
      $region31: #{tpu_custom_call.1} parent=5 // pred_region
        %s171 = ssub.s32 %s16, 1
        %s172 = sand.u32 %s29, 1
        %s173 = scalar_lea.sflag [#allocation3], %s172
        %s174 = sand.u32 %s29, 1
        %s175 = smul.addr %s174, 32
        %s176 = scalar_lea.vmem [#allocation2], %s175
        // Predicated region
        $region33: #{tpu_custom_call.1} parent=31 // pred_check
          %p177 = pneg %p42
        $region34: #{tpu_custom_call.1} parent=31 // pred_check_branch
          %179 = sbr.rel (%p177) target = $region36
        $region35: #{tpu_custom_call.1} parent=31 // pred_region
          %180 = dma.done %s173, 512
        $region36: #{tpu_custom_call.1} parent=31 // pred_fallthru
          _
        // Predicated region
        $region37: #{tpu_custom_call.1} parent=31 // pred_check
          %p181 = pneg %p63
        $region38: #{tpu_custom_call.1} parent=31 // pred_check_branch
          %183 = sbr.rel (%p181) target = $region40
        $region39: #{tpu_custom_call.1} parent=31 // pred_region
          %184 = dma.done [#allocation6], 1024
        $region40: #{tpu_custom_call.1} parent=31 // pred_fallthru
          _
        %s185 = sand.u32 %s29, 1
        %s186 = scalar_lea.sflag [#allocation3], %s185
        %s187 = sand.u32 %s29, 1
        %s188 = smul.addr %s187, 32
        %s189 = scalar_lea.vmem [#allocation2], %s188
        %p190 = pneg %p42
        %p191 = pneg %p39
        %p192 = pneg %p63
        %p193 = pneg %p60
        %p194 = pneg %p84
        %p195 = pneg %p81
        %p196 = pneg %p110
        %p197 = pneg %p107
        %s198 = sand.u32 %s97, 1
        %s199 = scalar_lea.sflag [#allocation4], %s198
        %s200 = sand.u32 %s97, 1
        %s201 = smul.addr %s200, 32
        %s202 = scalar_lea.vmem [#allocation7], %s201
        %v204 = vld [vmem:[%s176] sm:$0xff]
        %v205 = vld [vmem:[%s176 + $0x8] sm:$0xff]
        %v206 = vld [vmem:[%s176 + $0x10] sm:$0xff]
        %v207 = vld [vmem:[%s176 + $0x18] sm:$0xff]
        %v208 = vld [vmem:[%s2] sm:$0xff]
        %v209 = vld [vmem:[%s2 + $0x8] sm:$0xff]
        %v210 = vld [vmem:[%s2 + $0x10] sm:$0xff]
        %v211 = vld [vmem:[%s2 + $0x18] sm:$0xff]
        %v212 = vld [vmem:[#allocation5] sm:$0xf]
        %v213 = vld [vmem:[#allocation5 + $0x4] sm:$0xf]
        %v214 = vld [vmem:[#allocation5 + $0x8] sm:$0xf]
        %v215 = vld [vmem:[#allocation5 + $0xc] sm:$0xf]
        %v216 = vpack.c.bf16 %v205, %v204
        %v217 = vpack.c.bf16 %v207, %v206
        %219 = vset.pattern.permute.xlu0 0
        %220 = vperm.xlu0 %219, %v208
        %v221 = vpop.permute.xlu0 %220
        %224 = vset.pattern.permute.xlu0 0
        %225 = vperm.xlu0 %224, %v209
        %v226 = vpop.permute.xlu0 %225
        %229 = vset.pattern.permute.xlu0 0
        %230 = vperm.xlu0 %229, %v210
        %v231 = vpop.permute.xlu0 %230
        %234 = vset.pattern.permute.xlu0 0
        %235 = vperm.xlu0 %234, %v211
        %v236 = vpop.permute.xlu0 %235
        %v242 = vunpack.c.l.b16 %v212
        %v243 = vunpack.c.l.b16 %v213
        %v244 = vunpack.c.l.b16 %v214
        %v245 = vunpack.c.l.b16 %v215
        %v246 = vpack.c.b16 %v243, %v242
        %v247 = vpack.c.b16 %v245, %v244
        %vm248 = vcmask 261120
        %v250 = vsel %vm248, %v246, 0
        %v253 = vsel %vm248, %v247, 0
        %255 = vmatprep.subr.bf16.mxu0 0
        %256 = vmatpush1.bf16.msra.mxu0 0
        %257 = vmatprep.subr.bf16.mxu0 0
        %258 = vmatpush1.bf16.msra.mxu0 0
        %259 = vmatprep.subr.bf16.mxu0 0
        %260 = vmatpush1.bf16.msra.mxu0 0
        %261 = vmatprep.subr.bf16.mxu0 0
        %262 = vmatpush1.bf16.msra.mxu0 0
        %263 = vmatprep.subr.bf16.mxu0 0
        %264 = vmatpush1.bf16.msra.mxu0 0
        %265 = vmatprep.subr.bf16.mxu0 0
        %266 = vmatpush1.bf16.msra.mxu0 0
        %267 = vmatprep.subr.bf16.mxu0 0
        %268 = vmatpush1.bf16.msra.mxu0 %v217
        %269 = vmatprep.subr.bf16.mxu0 0
        %270 = vmatpush1.bf16.msra.mxu0 %v216
        %271 = vmatprep.subr.bf16.mxu0 0
        %272 = vmatpush2.bf16.msra.mxu0 0
        %273 = vmatprep.subr.bf16.mxu0 0
        %274 = vmatpush2.bf16.msra.mxu0 0
        %275 = vmatprep.subr.bf16.mxu0 0
        %276 = vmatpush2.bf16.msra.mxu0 0
        %277 = vmatprep.subr.bf16.mxu0 0
        %278 = vmatpush2.bf16.msra.mxu0 0
        %279 = vmatprep.subr.bf16.mxu0 0
        %280 = vmatpush2.bf16.msra.mxu0 0
        %281 = vmatprep.subr.bf16.mxu0 0
        %282 = vmatpush2.bf16.msra.mxu0 0
        %283 = vmatprep.subr.bf16.mxu0 0
        %284 = vmatpush2.bf16.msra.mxu0 0
        %285 = vmatprep.subr.bf16.mxu0 0
        %286 = vmatpush2.bf16.msra.mxu0 0
        %287 = vmatprep.mubr.bf16.mxu0 0
        %288 = vmatmul.mubr.bf16.gmra.mxu0 %v250
        %v289 = vpop.f32.mrf.mxu0
        %v290 = vadd.f32 %v221, %v289
        %v291 = vpop.f32.mrf.mxu0
        %v292 = vpop.f32.mrf.mxu0
        %v293 = vadd.f32 %v226, %v292
        %v294 = vpop.f32.mrf.mxu0
        %295 = vmatprep.mubr.bf16.mxu0 0
        %296 = vmatmul.mubr.bf16.gmra.mxu0 %v253
        %v297 = vpop.f32.mrf.mxu0
        %v298 = vadd.f32 %v231, %v297
        %v299 = vpop.f32.mrf.mxu0
        %v300 = vpop.f32.mrf.mxu0
        %v301 = vadd.f32 %v236, %v300
        %v302 = vpop.f32.mrf.mxu0
        %303 = vdwg.mxu0
        %v304 = vmax.f32 %v290, 0.0
        %v305 = vmax.f32 %v293, 0.0
        %v306 = vmax.f32 %v298, 0.0
        %v307 = vmax.f32 %v301, 0.0
        %s308 = scalar_lea.vmem [#allocation5], 16
        %v309 = vld [vmem:[%s308] sm:$0xf]
        %v310 = vld [vmem:[%s308 + $0x4] sm:$0xf]
        %v311 = vld [vmem:[%s308 + $0x8] sm:$0xf]
        %v312 = vld [vmem:[%s308 + $0xc] sm:$0xf]
        %v313 = vpack.c.bf16 %v305, %v304
        %v314 = vpack.c.bf16 %v307, %v306
        %315 = vset.pattern.permute.xlu0 1
        %316 = vperm.xlu0 %315, %v208
        %v317 = vpop.permute.xlu0 %316
        %319 = vset.pattern.permute.xlu0 1
        %320 = vperm.xlu0 %319, %v209
        %v321 = vpop.permute.xlu0 %320
        %323 = vset.pattern.permute.xlu0 1
        %324 = vperm.xlu0 %323, %v210
        %v325 = vpop.permute.xlu0 %324
        %327 = vset.pattern.permute.xlu0 1
        %328 = vperm.xlu0 %327, %v211
        %v329 = vpop.permute.xlu0 %328
        %v335 = vunpack.c.l.b16 %v309
        %v336 = vunpack.c.l.b16 %v310
        %v337 = vunpack.c.l.b16 %v311
        %v338 = vunpack.c.l.b16 %v312
        %v339 = vpack.c.b16 %v336, %v335
        %v340 = vpack.c.b16 %v338, %v337
        %v342 = vsel %vm248, %v339, 0
        %v345 = vsel %vm248, %v340, 0
        %347 = vmatprep.subr.bf16.mxu0 0
        %348 = vmatpush1.bf16.msra.mxu0 0
        %349 = vmatprep.subr.bf16.mxu0 0
        %350 = vmatpush1.bf16.msra.mxu0 0
        %351 = vmatprep.subr.bf16.mxu0 0
        %352 = vmatpush1.bf16.msra.mxu0 0
        %353 = vmatprep.subr.bf16.mxu0 0
        %354 = vmatpush1.bf16.msra.mxu0 0
        %355 = vmatprep.subr.bf16.mxu0 0
        %356 = vmatpush1.bf16.msra.mxu0 0
        %357 = vmatprep.subr.bf16.mxu0 0
        %358 = vmatpush1.bf16.msra.mxu0 0
        %359 = vmatprep.subr.bf16.mxu0 0
        %360 = vmatpush1.bf16.msra.mxu0 %v314
        %361 = vmatprep.subr.bf16.mxu0 0
        %362 = vmatpush1.bf16.msra.mxu0 %v313
        %363 = vmatprep.subr.bf16.mxu0 0
        %364 = vmatpush2.bf16.msra.mxu0 0
        %365 = vmatprep.subr.bf16.mxu0 0
        %366 = vmatpush2.bf16.msra.mxu0 0
        %367 = vmatprep.subr.bf16.mxu0 0
        %368 = vmatpush2.bf16.msra.mxu0 0
        %369 = vmatprep.subr.bf16.mxu0 0
        %370 = vmatpush2.bf16.msra.mxu0 0
        %371 = vmatprep.subr.bf16.mxu0 0
        %372 = vmatpush2.bf16.msra.mxu0 0
        %373 = vmatprep.subr.bf16.mxu0 0
        %374 = vmatpush2.bf16.msra.mxu0 0
        %375 = vmatprep.subr.bf16.mxu0 0
        %376 = vmatpush2.bf16.msra.mxu0 0
        %377 = vmatprep.subr.bf16.mxu0 0
        %378 = vmatpush2.bf16.msra.mxu0 0
        %379 = vmatprep.mubr.bf16.mxu0 0
        %380 = vmatmul.mubr.bf16.gmra.mxu0 %v342
        %v381 = vpop.f32.mrf.mxu0
        %v382 = vadd.f32 %v317, %v381
        %v383 = vpop.f32.mrf.mxu0
        %v384 = vpop.f32.mrf.mxu0
        %v385 = vadd.f32 %v321, %v384
        %v386 = vpop.f32.mrf.mxu0
        %387 = vmatprep.mubr.bf16.mxu0 0
        %388 = vmatmul.mubr.bf16.gmra.mxu0 %v345
        %v389 = vpop.f32.mrf.mxu0
        %v390 = vadd.f32 %v325, %v389
        %v391 = vpop.f32.mrf.mxu0
        %v392 = vpop.f32.mrf.mxu0
        %v393 = vadd.f32 %v329, %v392
        %v394 = vpop.f32.mrf.mxu0
        %395 = vdwg.mxu0
        %v396 = vmax.f32 %v382, 0.0
        %v397 = vmax.f32 %v385, 0.0
        %v398 = vmax.f32 %v390, 0.0
        %v399 = vmax.f32 %v393, 0.0
        %s400 = scalar_lea.vmem [#allocation5], 32
        %v401 = vld [vmem:[%s400] sm:$0xf]
        %v402 = vld [vmem:[%s400 + $0x4] sm:$0xf]
        %v403 = vld [vmem:[%s400 + $0x8] sm:$0xf]
        %v404 = vld [vmem:[%s400 + $0xc] sm:$0xf]
        %v405 = vpack.c.bf16 %v397, %v396
        %v406 = vpack.c.bf16 %v399, %v398
        %407 = vset.pattern.permute.xlu0 2
        %408 = vperm.xlu0 %407, %v208
        %v409 = vpop.permute.xlu0 %408
        %411 = vset.pattern.permute.xlu0 2
        %412 = vperm.xlu0 %411, %v209
        %v413 = vpop.permute.xlu0 %412
        %415 = vset.pattern.permute.xlu0 2
        %416 = vperm.xlu0 %415, %v210
        %v417 = vpop.permute.xlu0 %416
        %419 = vset.pattern.permute.xlu0 2
        %420 = vperm.xlu0 %419, %v211
        %v421 = vpop.permute.xlu0 %420
        %v427 = vunpack.c.l.b16 %v401
        %v428 = vunpack.c.l.b16 %v402
        %v429 = vunpack.c.l.b16 %v403
        %v430 = vunpack.c.l.b16 %v404
        %v431 = vpack.c.b16 %v428, %v427
        %v432 = vpack.c.b16 %v430, %v429
        %v434 = vsel %vm248, %v431, 0
        %v437 = vsel %vm248, %v432, 0
        %439 = vmatprep.subr.bf16.mxu0 0
        %440 = vmatpush1.bf16.msra.mxu0 0
        %441 = vmatprep.subr.bf16.mxu0 0
        %442 = vmatpush1.bf16.msra.mxu0 0
        %443 = vmatprep.subr.bf16.mxu0 0
        %444 = vmatpush1.bf16.msra.mxu0 0
        %445 = vmatprep.subr.bf16.mxu0 0
        %446 = vmatpush1.bf16.msra.mxu0 0
        %447 = vmatprep.subr.bf16.mxu0 0
        %448 = vmatpush1.bf16.msra.mxu0 0
        %449 = vmatprep.subr.bf16.mxu0 0
        %450 = vmatpush1.bf16.msra.mxu0 0
        %451 = vmatprep.subr.bf16.mxu0 0
        %452 = vmatpush1.bf16.msra.mxu0 %v406
        %453 = vmatprep.subr.bf16.mxu0 0
        %454 = vmatpush1.bf16.msra.mxu0 %v405
        %455 = vmatprep.subr.bf16.mxu0 0
        %456 = vmatpush2.bf16.msra.mxu0 0
        %457 = vmatprep.subr.bf16.mxu0 0
        %458 = vmatpush2.bf16.msra.mxu0 0
        %459 = vmatprep.subr.bf16.mxu0 0
        %460 = vmatpush2.bf16.msra.mxu0 0
        %461 = vmatprep.subr.bf16.mxu0 0
        %462 = vmatpush2.bf16.msra.mxu0 0
        %463 = vmatprep.subr.bf16.mxu0 0
        %464 = vmatpush2.bf16.msra.mxu0 0
        %465 = vmatprep.subr.bf16.mxu0 0
        %466 = vmatpush2.bf16.msra.mxu0 0
        %467 = vmatprep.subr.bf16.mxu0 0
        %468 = vmatpush2.bf16.msra.mxu0 0
        %469 = vmatprep.subr.bf16.mxu0 0
        %470 = vmatpush2.bf16.msra.mxu0 0
        %471 = vmatprep.mubr.bf16.mxu0 0
        %472 = vmatmul.mubr.bf16.gmra.mxu0 %v434
        %v473 = vpop.f32.mrf.mxu0
        %v474 = vadd.f32 %v409, %v473
        %v475 = vpop.f32.mrf.mxu0
        %v476 = vpop.f32.mrf.mxu0
        %v477 = vadd.f32 %v413, %v476
        %v478 = vpop.f32.mrf.mxu0
        %479 = vmatprep.mubr.bf16.mxu0 0
        %480 = vmatmul.mubr.bf16.gmra.mxu0 %v437
        %v481 = vpop.f32.mrf.mxu0
        %v482 = vadd.f32 %v417, %v481
        %v483 = vpop.f32.mrf.mxu0
        %v484 = vpop.f32.mrf.mxu0
        %v485 = vadd.f32 %v421, %v484
        %v486 = vpop.f32.mrf.mxu0
        %487 = vdwg.mxu0
        %v488 = vmax.f32 %v474, 0.0
        %v489 = vmax.f32 %v477, 0.0
        %v490 = vmax.f32 %v482, 0.0
        %v491 = vmax.f32 %v485, 0.0
        %s492 = scalar_lea.vmem [#allocation5], 48
        %v493 = vld [vmem:[%s492] sm:$0xf]
        %v494 = vld [vmem:[%s492 + $0x4] sm:$0xf]
        %v495 = vld [vmem:[%s492 + $0x8] sm:$0xf]
        %v496 = vld [vmem:[%s492 + $0xc] sm:$0xf]
        %v497 = vpack.c.bf16 %v489, %v488
        %v498 = vpack.c.bf16 %v491, %v490
        %499 = vset.pattern.permute.xlu0 3
        %500 = vperm.xlu0 %499, %v208
        %v501 = vpop.permute.xlu0 %500
        %503 = vset.pattern.permute.xlu0 3
        %504 = vperm.xlu0 %503, %v209
        %v505 = vpop.permute.xlu0 %504
        %507 = vset.pattern.permute.xlu0 3
        %508 = vperm.xlu0 %507, %v210
        %v509 = vpop.permute.xlu0 %508
        %511 = vset.pattern.permute.xlu0 3
        %512 = vperm.xlu0 %511, %v211
        %v513 = vpop.permute.xlu0 %512
        %v519 = vunpack.c.l.b16 %v493
        %v520 = vunpack.c.l.b16 %v494
        %v521 = vunpack.c.l.b16 %v495
        %v522 = vunpack.c.l.b16 %v496
        %v523 = vpack.c.b16 %v520, %v519
        %v524 = vpack.c.b16 %v522, %v521
        %v526 = vsel %vm248, %v523, 0
        %v529 = vsel %vm248, %v524, 0
        %531 = vmatprep.subr.bf16.mxu0 0
        %532 = vmatpush1.bf16.msra.mxu0 0
        %533 = vmatprep.subr.bf16.mxu0 0
        %534 = vmatpush1.bf16.msra.mxu0 0
        %535 = vmatprep.subr.bf16.mxu0 0
        %536 = vmatpush1.bf16.msra.mxu0 0
        %537 = vmatprep.subr.bf16.mxu0 0
        %538 = vmatpush1.bf16.msra.mxu0 0
        %539 = vmatprep.subr.bf16.mxu0 0
        %540 = vmatpush1.bf16.msra.mxu0 0
        %541 = vmatprep.subr.bf16.mxu0 0
        %542 = vmatpush1.bf16.msra.mxu0 0
        %543 = vmatprep.subr.bf16.mxu0 0
        %544 = vmatpush1.bf16.msra.mxu0 %v498
        %545 = vmatprep.subr.bf16.mxu0 0
        %546 = vmatpush1.bf16.msra.mxu0 %v497
        %547 = vmatprep.subr.bf16.mxu0 0
        %548 = vmatpush2.bf16.msra.mxu0 0
        %549 = vmatprep.subr.bf16.mxu0 0
        %550 = vmatpush2.bf16.msra.mxu0 0
        %551 = vmatprep.subr.bf16.mxu0 0
        %552 = vmatpush2.bf16.msra.mxu0 0
        %553 = vmatprep.subr.bf16.mxu0 0
        %554 = vmatpush2.bf16.msra.mxu0 0
        %555 = vmatprep.subr.bf16.mxu0 0
        %556 = vmatpush2.bf16.msra.mxu0 0
        %557 = vmatprep.subr.bf16.mxu0 0
        %558 = vmatpush2.bf16.msra.mxu0 0
        %559 = vmatprep.subr.bf16.mxu0 0
        %560 = vmatpush2.bf16.msra.mxu0 0
        %561 = vmatprep.subr.bf16.mxu0 0
        %562 = vmatpush2.bf16.msra.mxu0 0
        %563 = vmatprep.mubr.bf16.mxu0 0
        %564 = vmatmul.mubr.bf16.gmra.mxu0 %v526
        %v565 = vpop.f32.mrf.mxu0
        %v566 = vadd.f32 %v501, %v565
        %v567 = vpop.f32.mrf.mxu0
        %v568 = vpop.f32.mrf.mxu0
        %v569 = vadd.f32 %v505, %v568
        %v570 = vpop.f32.mrf.mxu0
        %571 = vmatprep.mubr.bf16.mxu0 0
        %572 = vmatmul.mubr.bf16.gmra.mxu0 %v529
        %v573 = vpop.f32.mrf.mxu0
        %v574 = vadd.f32 %v509, %v573
        %v575 = vpop.f32.mrf.mxu0
        %v576 = vpop.f32.mrf.mxu0
        %v577 = vadd.f32 %v513, %v576
        %v578 = vpop.f32.mrf.mxu0
        %579 = vdwg.mxu0
        %v580 = vmax.f32 %v566, %v569
        %v581 = vmax.f32 %v574, %v577
        %v582 = vmax.f32 %v580, %v581
        %v583 = vrot.slane %v582, 4
        %v584 = vmax.f32 %v582, %v583
        %v585 = vrot.slane %v584, 2
        %v586 = vmax.f32 %v584, %v585
        %v587 = vrot.slane %v586, 1
        %v588 = vmax.f32 %v586, %v587
        %v589 = vsub.f32 %v566, %v588
        %v590 = vsub.f32 %v569, %v588
        %v591 = vsub.f32 %v574, %v588
        %v592 = vsub.f32 %v577, %v588
        %v593 = vmul.f32 %v589, 1.442695
        %v594 = vpow.pop %v593
        %v595 = vmul.f32 %v590, 1.442695
        %v596 = vpow.pop %v595
        %v597 = vmul.f32 %v591, 1.442695
        %v598 = vpow.pop %v597
        %v599 = vmul.f32 %v592, 1.442695
        %v600 = vpow.pop %v599
        %v601 = vadd.f32 %v594, %v596
        %v602 = vadd.f32 %v601, %v598
        %v603 = vadd.f32 %v602, %v600
        %v604 = vrot.slane %v603, 4
        %v605 = vadd.f32 %v603, %v604
        %v606 = vrot.slane %v605, 2
        %v607 = vadd.f32 %v605, %v606
        %v608 = vrot.slane %v607, 1
        %v609 = vadd.f32 %v607, %v608
        %v610 = vrcp.pop %v609
        %v611 = vmul.f32 %v594, %v610
        %v612 = vmul.f32 %v596, %v610
        %v613 = vmul.f32 %v598, %v610
        %v614 = vmul.f32 %v600, %v610
        %615 = vst [vmem:[%s202] sm:$0xff] %v611
        %616 = vst [vmem:[%s202 + $0x8] sm:$0xff] %v612
        %617 = vst [vmem:[%s202 + $0x10] sm:$0xff] %v613
        %618 = vst [vmem:[%s202 + $0x18] sm:$0xff] %v614
        %s619 = sand.u32 %s97, 1
        %s620 = scalar_lea.sflag [#allocation4], %s619
        %s621 = sand.u32 %s97, 1
        %s622 = smul.addr %s621, 32
        %s623 = scalar_lea.vmem [#allocation7], %s622
        // Predicated region
        $region41: #{tpu_custom_call.1} parent=31 // pred_check
          %p624 = pneg %p107
        $region42: #{tpu_custom_call.1} parent=31 // pred_check_branch
          %626 = sbr.rel (%p624) target = $region44
        $region43: #{tpu_custom_call.1} parent=31 // pred_region
          %s628 = ssub.s32 512, 512
          %629 = vsyncadd %s620, %s628
          %s630 = smul.addr %s21, 128
          %s631 = scalar_lea.hbm %s3, %s630
          %s632 = sshll.u32 %s623, 4
          %s633 = int_to_ptr.vmem [resolvable:$true] %s632
          %638 = dma.vmem_to_hbm [thread:$0]  %s633, 512, %s631, %s620, 128, 384, 8
        $region44: #{tpu_custom_call.1} parent=31 // pred_fallthru
          _
      $region32: #{tpu_custom_call.1} parent=5 // pred_fallthru
        _
      %p639 = scmp.le.s32.totalorder 2, %s16
      // Predicated region
      $region45: #{tpu_custom_call.1} parent=5 // pred_check
        %p640 = pneg %p639
      $region46: #{tpu_custom_call.1} parent=5 // pred_check_branch
        %642 = sbr.rel (%p640) target = $region48
      $region47: #{tpu_custom_call.1} parent=5 // pred_region
        %s643 = ssub.s32 %s16, 2
        // Predicated region
        $region49: #{tpu_custom_call.1} parent=47 // pred_check
          %p644 = pneg %p113
        $region50: #{tpu_custom_call.1} parent=47 // pred_check_branch
          %646 = sbr.rel (%p644) target = $region52
        $region51: #{tpu_custom_call.1} parent=47 // pred_region
          %s647 = sand.u32 %s98, 1
          %s648 = scalar_lea.sflag [#allocation4], %s647
          %s649 = sand.u32 %s98, 1
          %s650 = smul.addr %s649, 32
          %s651 = scalar_lea.vmem [#allocation7], %s650
          %652 = dma.done %s648, 512
        $region52: #{tpu_custom_call.1} parent=47 // pred_fallthru
          _
      $region48: #{tpu_custom_call.1} parent=5 // pred_fallthru
        _
    $region6: #{tpu_custom_call.1} parent=1 // loop_footer
      %s20 = sadd.s32 1, %s16
    $region7: #{tpu_custom_call.1} parent=1 // loop_footer_branch
      %15 = sbr.rel target = $region3
    $region8: #{tpu_custom_call.1} parent=1 // loop_exit
      _
    %653 = vsyncpa [#allocation3], 1
    %s654 = scalar_lea.sflag [#allocation3], 1
    %655 = vsyncpa %s654, 1
    %656 = vsyncpa [#allocation6], 1
    %657 = vsyncpa [#allocation4], 1
    %s658 = scalar_lea.sflag [#allocation4], 1
    %659 = vsyncpa %s658, 1

</llo_original>
